<compile_context>
chip_gen: v7x
topology: tpu7x:2x2x1
jax: 0.10.0
libtpu: 0.0.40
codegen_flags: <defaults>
</compile_context>

<pallas_src>
import functools

import jax
import jax.numpy as jnp
from jax.experimental import pallas as pl
from jax.experimental.pallas import tpu as pltpu


DISCRIMINATOR_WEIGHT = {
    "pred_1": 1.0,
    "pred_2": 1.0,
    "pred_4": 1.0,
    "pred_6": 1.0,
    "pred_7": 1.0,
}


def _round_up(v, m):
    return (v + m - 1) // m * m


def _cdiv(a, b):
    return (a + b - 1) // b


# ---------------------------------------------------------------------------
# Kernel 1: fused total-variation + pooled-MSE partial sums (P planes / step)
# ---------------------------------------------------------------------------
def _tv_pool_mse_kernel(*refs, real_h, padded_h, kernel_size, use_roll):
    if use_roll:
        x_ref, c_ref, rip_ref, pw_ref, res_ref = refs
        dw_ref = None
    else:
        x_ref, c_ref, rip_ref, pw_ref, dw_ref, res_ref = refs

    H, Hp, k = real_h, padded_h, kernel_size
    OH = H - k + 1
    PH, W = x_ref.shape                      # P planes * Hp rows, W on lanes

    x = x_ref[...].astype(jnp.float32)       # upcast after the VMEM load (bf16 ok)
    c = c_ref[...].astype(jnp.float32)
    rip = rip_ref[...]                       # (PH, 1) int32: row index within plane

    # --- TV along H: sublane-shifted diff (VPU, exact f32) ------------------
    dyf = x[1:, :] - x[:-1, :]                                   # (PH-1, W)
    dy = jnp.where(rip[0:PH - 1, :] < H - 1, dyf, 0.0)           # drop cross-plane/pad rows
    tv_y_ss = jnp.sum(dy * dy)

    # --- TV along W: lane-shifted diff ---------------------------------------
    if use_roll:
        # XLU roll; the single wrapped column is removed with a correction term
        # that is identical for either rotate direction, so this stays exact f32.
        rolled = pltpu.roll(x, shift=1, axis=1)
        dall = rolled - x
        lane = jax.lax.broadcasted_iota(jnp.int32, (PH, W), 1)
        first = jnp.sum(jnp.where(lane == 0, x, 0.0), axis=1, keepdims=True)
        last = jnp.sum(jnp.where(lane == W - 1, x, 0.0), axis=1, keepdims=True)
        wrap = first - last
        tv_x_ss = jnp.sum(dall * dall) - jnp.sum(wrap * wrap)
    else:
        # Small-W fallback: 0/±1 difference matrix on the MXU (default MXU
        # precision rounds x to bf16 here; error on the final loss is ~1e-4 rel).
        dx = jnp.dot(x, dw_ref[...], preferred_element_type=jnp.float32)
        tv_x_ss = jnp.sum(dx * dx)

    # --- pooled MSE: pool(x) - pool(c) == pool(x - c) ------------------------
    d = x - c                                                     # (PH, W)
    t = jnp.dot(d, pw_ref[...], preferred_element_type=jnp.float32)  # (PH, OWp)
    R = PH - k + 1
    acc = t[0:R, :]
    for j in range(1, k):                    # H-direction window sum: k-1 shifted adds
        acc = acc + t[j:j + R, :]
    pooled = jnp.where(rip[0:R, :] < OH, acc, 0.0)    # keep windows fully inside a plane
    mse_ss = jnp.sum(pooled * pooled)        # 1/k^2 scale applied once in the wrapper

    # --- emit one dense (8, 128) partial-sum tile (no masked stores) ---------
    sub = jax.lax.broadcasted_iota(jnp.int32, (8, 128), 0)
    ln = jax.lax.broadcasted_iota(jnp.int32, (8, 128), 1)
    res_ref[...] = jnp.where(
        (sub == 0) & (ln == 0), tv_y_ss,
        jnp.where((sub == 0) & (ln == 1), tv_x_ss,
                  jnp.where((sub == 0) & (ln == 2), mse_ss, 0.0)))


def _pool_matrix(size, k, out_cols):
    # (size, out_cols) 0/1 window-sum matrix, zero-padded to a lane-dense output.
    o = size - k + 1
    idx = jnp.arange(size)[:, None]
    oidx = jnp.arange(out_cols)[None, :]
    return ((oidx < o) & (idx >= oidx) & (idx < oidx + k)).astype(jnp.float32)


def _diff_matrix(size, out_cols):
    # (size, out_cols) 0/±1 matrix with (x @ D)[:, j] = x[:, j+1] - x[:, j] for j < size-1.
    idx = jnp.arange(size)[:, None]
    j = jnp.arange(out_cols)[None, :]
    valid = j < size - 1
    plus = (valid & (idx == j + 1)).astype(jnp.float32)
    minus = (valid & (idx == j)).astype(jnp.float32)
    return plus - minus


def _choose_plane_batch(n_planes, rows_per_plane, width):
    # 2 image inputs x 2 pipeline buffers x P*Hp*max(W,128)*4 B <= ~4 MiB, leaving
    # most of the 32 MiB scoped-VMEM request for in-kernel temporaries — safe on
    # v5e/v6e (128 MiB physical) and on v7x (64 MiB physical, 32 MiB default scoped).
    plane_bytes = rows_per_plane * max(width, 128) * 4
    cap = max(1, (4 * 1024 * 1024) // (4 * plane_bytes))
    # >= 2 grid steps whenever possible so both v7x TensorCores get work.
    return min(cap, max(1, _cdiv(n_planes, 2)))


def fused_tv_pooled_mse(batch_output_nchw, batch_content_nchw, kernel_size=10):
    """Returns (tv_loss, pooled_mse_loss), reading batch_output from HBM once.

    total_variation_loss follows the NHWC intent of the reference (diffs along
    the spatial H / W axes); batch_output keeps its native NCHW layout so W
    stays on lanes and no transpose copy is made.
    """
    B, C, H, W = batch_output_nchw.shape
    k = kernel_size
    assert H >= k and W >= k and H >= 2 and W >= 2
    OH, OW = H - k + 1, W - k + 1
    N = B * C
    Hp = _round_up(H, 8)
    OWp = _round_up(OW, 128)
    use_roll = (W % 128 == 0)

    x = batch_output_nchw.reshape(N, H, W)
    c = batch_content_nchw.reshape(N, H, W)
    if Hp != H:                                    # zero rows contribute nothing
        x = jnp.pad(x, ((0, 0), (0, Hp - H), (0, 0)))
        c = jnp.pad(c, ((0, 0), (0, Hp - H), (0, 0)))

    P = _choose_plane_batch(N, Hp, W)
    G = _cdiv(N, P)
    N_pad = G * P
    if N_pad != N:                                 # zero planes contribute nothing
        x = jnp.pad(x, ((0, N_pad - N), (0, 0), (0, 0)))
        c = jnp.pad(c, ((0, N_pad - N), (0, 0), (0, 0)))

    x = x.reshape(N_pad * Hp, W)                   # lane-dense 2-D slabs
    c = c.reshape(N_pad * Hp, W)
    rip = jnp.tile(jnp.arange(Hp, dtype=jnp.int32), N_pad).reshape(N_pad * Hp, 1)
    pw = _pool_matrix(W, k, OWp)                   # resident (W, OWp) pooling matrix

    operands = [x, c, rip, pw]
    in_specs = [
        pl.BlockSpec((P * Hp, W), lambda i: (i, 0)),
        pl.BlockSpec((P * Hp, W), lambda i: (i, 0)),
        pl.BlockSpec((P * Hp, 1), lambda i: (i, 0)),
        pl.BlockSpec((W, OWp), lambda i: (0, 0)),
    ]
    matmul_flops = 2 * N_pad * Hp * W * OWp
    if not use_roll:
        DWp = _round_up(W - 1, 128)
        operands.append(_diff_matrix(W, DWp))      # tiny: only taken when W < 128-aligned
        in_specs.append(pl.BlockSpec((W, DWp), lambda i: (0, 0)))
        matmul_flops += 2 * N_pad * Hp * W * DWp

    itemsize = jnp.dtype(batch_output_nchw.dtype).itemsize
    flops = matmul_flops + 14 * N_pad * Hp * W + k * N_pad * Hp * OWp
    bytes_accessed = (2 * N_pad * Hp * W * itemsize + N_pad * Hp * 4
                      + W * OWp * 4 + G * 8 * 128 * 4)

    partial = pl.pallas_call(
        functools.partial(
            _tv_pool_mse_kernel,
            real_h=H, padded_h=Hp, kernel_size=k, use_roll=use_roll),
        out_shape=jax.ShapeDtypeStruct((G * 8, 128), jnp.float32),
        grid=(G,),
        in_specs=in_specs,
        out_specs=pl.BlockSpec((8, 128), lambda i: (i, 0)),
        compiler_params=pltpu.CompilerParams(
            dimension_semantics=("parallel",),
            vmem_limit_bytes=32 * 1024 * 1024,
        ),
        cost_estimate=pl.CostEstimate(
            flops=int(flops), transcendentals=0, bytes_accessed=int(bytes_accessed)),
    )(*operands)

    sums = jnp.sum(partial, axis=0)                # [tv_y_ss, tv_x_ss, mse_ss, 0, ...]

    y_tv = jnp.sqrt(sums[0])
    x_tv = jnp.sqrt(sums[1])
    tv_loss = 2.0 * (
        y_tv / float((H - 1) * W * C) + x_tv / float(H * (W - 1) * C)
    ) / float(B)

    inv_win = 1.0 / float(k * k)
    mse_loss = sums[2] * (inv_win * inv_win) / float(B * C * OH * OW)
    return tv_loss, mse_loss


# ---------------------------------------------------------------------------
# Kernel 2: fused weighted BCEWithLogitsLoss over many prediction heads
#   target = 1 : softplus(-x);  target = 0 : softplus(+x);  per-head mean
# ---------------------------------------------------------------------------
def _fused_bce_kernel(x_ref, sgn_ref, w_ref, out_ref):
    @pl.when(pl.program_id(0) == 0)
    def _():
        out_ref[0, 0] = 0.0

    z = sgn_ref[...] * x_ref[...]             # (TR,1) sign broadcast over (TR,128) logits
    # Numerically stable softplus.  log(1+e) instead of log1p(e): per-element
    # absolute error < 6e-8, far below the f32 accumulation noise of this
    # reduction, and it stays on universally supported kernel lowerings.
    sp = jnp.maximum(z, 0.0) + jnp.log(1.0 + jnp.exp(-jnp.abs(z)))
    out_ref[0, 0] += jnp.sum(w_ref[...] * sp)


def fused_weighted_bce(segments):
    """segments: list of (pred, target_is_one, weight).
    Returns sum_seg weight * mean(BCEWithLogits(pred, target)) as a scalar."""
    xs, sgns, ws = [], [], []
    for pred, target_is_one, weight in segments:
        flat = pred.astype(jnp.float32).reshape(-1)
        n = flat.shape[0]
        sgn = -1.0 if target_is_one else 1.0
        pad = (-n) % 128
        if pad:
            # Pad value chosen so softplus(sign * pad_value) == 0.0 exactly in f32.
            flat = jnp.concatenate([flat, jnp.full((pad,), -sgn * 1e4, jnp.float32)])
        r = (n + pad) // 128
        xs.append(flat.reshape(r, 128))
        sgns.append(jnp.full((r, 1), sgn, jnp.float32))
        ws.append(jnp.full((r, 1), float(weight) / float(n), jnp.float32))

    x = jnp.concatenate(xs, axis=0)
    sgn = jnp.concatenate(sgns, axis=0)
    w = jnp.concatenate(ws, axis=0)
    rows = x.shape[0]

    tr = min(256, _round_up(rows, 8))          # row block, multiple of 8 sublanes
    rows_p = _round_up(rows, tr)
    if rows_p != rows:                         # padded rows carry weight 0
        x = jnp.pad(x, ((0, rows_p - rows), (0, 0)))
        sgn = jnp.pad(sgn, ((0, rows_p - rows), (0, 0)), constant_values=1.0)
        w = jnp.pad(w, ((0, rows_p - rows), (0, 0)))
    g = rows_p // tr

    out = pl.pallas_call(
        _fused_bce_kernel,
        out_shape=jax.ShapeDtypeStruct((1, 1), jnp.float32),
        grid=(g,),
        in_specs=[
            pl.BlockSpec((tr, 128), lambda i: (i, 0)),
            pl.BlockSpec((tr, 1), lambda i: (i, 0)),
            pl.BlockSpec((tr, 1), lambda i: (i, 0)),
        ],
        out_specs=pl.BlockSpec(memory_space=pltpu.MemorySpace.SMEM),
        compiler_params=pltpu.CompilerParams(dimension_semantics=("arbitrary",)),
        cost_estimate=pl.CostEstimate(
            flops=int(10 * rows_p * 128),
            transcendentals=int(2 * rows_p * 128),
            bytes_accessed=int(rows_p * 130 * 4 + 4)),
    )(x, sgn, w)
    return out[0, 0]


# ---------------------------------------------------------------------------
# ArtGAN-style loss composition (generator + discriminator loss pieces)
# ---------------------------------------------------------------------------
def gen_style_loss(batch_content, batch_output, batch_output_preds, options):
    gener_loss = fused_weighted_bce(
        [(p, True, DISCRIMINATOR_WEIGHT[name]) for name, p in batch_output_preds.items()])
    tv_loss, img_loss = fused_tv_pooled_mse(batch_output, batch_content, kernel_size=10)
    # TODO(synk): feature_loss (encoder) and VGG_loss (decoder.style_statistic_loss)
    # depend on networks not defined in model.py.
    total = (options["discr_loss_weight"] * gener_loss
             + options["transformer_loss_weight"] * img_loss
             + options["tv_loss_weight"] * tv_loss)
    return total, gener_loss, img_loss, tv_loss


def dis_style_loss(art_preds, content_preds, output_preds, options):
    segments = (
        [(p, True, DISCRIMINATOR_WEIGHT[name]) for name, p in art_preds.items()]
        + [(p, False, DISCRIMINATOR_WEIGHT[name]) for name, p in content_preds.items()]
        + [(p, False, DISCRIMINATOR_WEIGHT[name]) for name, p in output_preds.items()])
    return options["discr_loss_weight"] * fused_weighted_bce(segments)


if __name__ == "__main__":
    key = jax.random.PRNGKey(0)
    B, C, H, W = 2, 4, 16, 16
    k1, k2, k3 = jax.random.split(key, 3)

    batch_output = jax.random.normal(k1, (B, C, H, W), jnp.float32)
    batch_content = jax.random.normal(k2, (B, C, H, W), jnp.float32)

    # Synthetic multi-scale discriminator logits (discriminator net is external).
    pred_shapes = {
        "pred_1": (B, 1, 8, 8),
        "pred_2": (B, 1, 8, 8),
        "pred_4": (B, 1, 4, 4),
        "pred_6": (B, 1, 4, 4),
        "pred_7": (B, 1, 2, 2),
    }
    pkeys = jax.random.split(k3, 3 * len(pred_shapes))
    output_preds, art_preds, content_preds = {}, {}, {}
    for i, (name, shp) in enumerate(pred_shapes.items()):
        output_preds[name] = jax.random.normal(pkeys[3 * i + 0], shp, jnp.float32)
        art_preds[name] = jax.random.normal(pkeys[3 * i + 1], shp, jnp.float32)
        content_preds[name] = jax.random.normal(pkeys[3 * i + 2], shp, jnp.float32)

    options = {
        "discr_loss_weight": 1.0,
        "transformer_loss_weight": 100.0,
        "tv_loss_weight": 10.0,
    }

    gen_total, g_adv, img_l, tv_l = gen_style_loss(
        batch_content, batch_output, output_preds, options)
    dis_total = dis_style_loss(art_preds, content_preds, output_preds, options)
    jax.block_until_ready((gen_total, g_adv, img_l, tv_l, dis_total))

    # ---- pure-JAX reference checks ------------------------------------------
    def softplus(z):
        return jnp.maximum(z, 0.0) + jnp.log1p(jnp.exp(-jnp.abs(z)))

    def bce_mean(pred, target_is_one):
        return jnp.mean(softplus(-pred if target_is_one else pred))

    ref_g_adv = sum(bce_mean(p, True) * DISCRIMINATOR_WEIGHT[name]
                    for name, p in output_preds.items())
    ref_dis = options["discr_loss_weight"] * (
        sum(bce_mean(p, True) * DISCRIMINATOR_WEIGHT[name] for name, p in art_preds.items())
        + sum(bce_mean(p, False) * DISCRIMINATOR_WEIGHT[name] for name, p in content_preds.items())
        + sum(bce_mean(p, False) * DISCRIMINATOR_WEIGHT[name] for name, p in output_preds.items()))

    def avg_pool_ref(v, ksz):
        s = jax.lax.reduce_window(v, 0.0, jax.lax.add,
                                  (1, 1, ksz, ksz), (1, 1, 1, 1), "VALID")
        return s / float(ksz * ksz)

    ref_img = jnp.mean((avg_pool_ref(batch_output, 10) - avg_pool_ref(batch_content, 10)) ** 2)

    img_nhwc = jnp.transpose(batch_output, (0, 2, 3, 1))
    y_tv = jnp.sqrt(jnp.sum((img_nhwc[:, 1:, :, :] - img_nhwc[:, :-1, :, :]) ** 2))
    x_tv = jnp.sqrt(jnp.sum((img_nhwc[:, :, 1:, :] - img_nhwc[:, :, :-1, :]) ** 2))
    ref_tv = 2.0 * (y_tv / float((H - 1) * W * C) + x_tv / float(H * (W - 1) * C)) / float(B)

    assert jnp.isfinite(gen_total) and jnp.isfinite(dis_total)
    assert jnp.allclose(g_adv, ref_g_adv, rtol=1e-4, atol=1e-6)
    assert jnp.allclose(dis_total, ref_dis, rtol=1e-4, atol=1e-6)
    assert jnp.allclose(tv_l, ref_tv, rtol=2e-2, atol=1e-5)
    assert jnp.allclose(img_l, ref_img, rtol=5e-2, atol=1e-5)
    print("KERNEL_OK")
</pallas_src>

<mosaic_0001>
module attributes {stable_mosaic.version = 11 : i64} {
  func.func @_fused_bce_kernel(%arg0: i32, %arg1: memref<8x128xf32, #tpu.memory_space<vmem>>, %arg2: memref<8x1xf32, #tpu.memory_space<vmem>>, %arg3: memref<8x1xf32, #tpu.memory_space<vmem>>, %arg4: memref<1x1xf32, #tpu.memory_space<smem>>) attributes {dimension_semantics = [#tpu.dimension_semantics<arbitrary>], iteration_bounds = array<i64: 1>, scalar_prefetch = 0 : i64, scratch_operands = 0 : i64, tpu.core_type = #tpu.core_type<tc>, window_params = [{transform_indices = @transform_0, window_bounds = array<i64: 8, 128>}, {transform_indices = @transform_1, window_bounds = array<i64: 8, 1>}, {transform_indices = @transform_2, window_bounds = array<i64: 8, 1>}, {transform_indices = @transform_3, window_bounds = array<i64: 1, 1>}]} {
    %c0_i32 = arith.constant 0 : i32
    %0 = arith.cmpi eq, %arg0, %c0_i32 : i32
    %1 = arith.extui %0 : i1 to i32
    %c0_i32_0 = arith.constant 0 : i32
    %2 = arith.cmpi ne, %1, %c0_i32_0 : i32
    scf.if %2 {
      %cst_13 = arith.constant 0.000000e+00 : f32
      %c0_14 = arith.constant 0 : index
      %c0_15 = arith.constant 0 : index
      %27 = memref.load %arg4[%c0_14, %c0_15] : memref<1x1xf32, #tpu.memory_space<smem>>
      memref.store %cst_13, %arg4[%c0_14, %c0_15] : memref<1x1xf32, #tpu.memory_space<smem>>
    } else {
    }
    %c0 = arith.constant 0 : index
    %c0_1 = arith.constant 0 : index
    %3 = vector.load %arg2[%c0, %c0_1] : memref<8x1xf32, #tpu.memory_space<vmem>>, vector<8x1xf32>
    %c0_2 = arith.constant 0 : index
    %c0_3 = arith.constant 0 : index
    %4 = vector.load %arg1[%c0_2, %c0_3] : memref<8x128xf32, #tpu.memory_space<vmem>>, vector<8x128xf32>
    %5 = vector.broadcast %3 : vector<8x1xf32> to vector<8x128xf32>
    %6 = arith.mulf %5, %4 : vector<8x128xf32>
    %cst = arith.constant 0.000000e+00 : f32
    %7 = vector.broadcast %cst : f32 to vector<8x128xf32>
    %8 = arith.maximumf %6, %7 : vector<8x128xf32>
    %9 = math.absf %6 : vector<8x128xf32>
    %cst_4 = arith.constant 0.000000e+00 : f32
    %10 = vector.broadcast %cst_4 : f32 to vector<8x128xf32>
    %11 = arith.subf %10, %9 : vector<8x128xf32>
    %12 = math.exp %11 : vector<8x128xf32>
    %cst_5 = arith.constant 1.000000e+00 : f32
    %13 = vector.broadcast %cst_5 : f32 to vector<8x128xf32>
    %14 = arith.addf %13, %12 : vector<8x128xf32>
    %15 = math.log %14 : vector<8x128xf32>
    %16 = arith.addf %8, %15 : vector<8x128xf32>
    %c0_6 = arith.constant 0 : index
    %c0_7 = arith.constant 0 : index
    %17 = memref.load %arg4[%c0_6, %c0_7] : memref<1x1xf32, #tpu.memory_space<smem>>
    %c0_8 = arith.constant 0 : index
    %c0_9 = arith.constant 0 : index
    %18 = vector.load %arg3[%c0_8, %c0_9] : memref<8x1xf32, #tpu.memory_space<vmem>>, vector<8x1xf32>
    %19 = vector.broadcast %18 : vector<8x1xf32> to vector<8x128xf32>
    %20 = arith.mulf %19, %16 : vector<8x128xf32>
    %21 = vector.shape_cast %20 : vector<8x128xf32> to vector<1x8x128xf32>
    %cst_10 = arith.constant dense<0.000000e+00> : vector<1xf32>
    %22 = vector.multi_reduction <add>, %21, %cst_10 [1, 2] : vector<1x8x128xf32> to vector<1xf32>
    %23 = vector.shape_cast %22 : vector<1xf32> to vector<1x1x1xf32>
    %24 = vector.extract %23[0, 0, 0] : f32 from vector<1x1x1xf32>
    %25 = arith.addf %17, %24 : f32
    %c0_11 = arith.constant 0 : index
    %c0_12 = arith.constant 0 : index
    %26 = memref.load %arg4[%c0_11, %c0_12] : memref<1x1xf32, #tpu.memory_space<smem>>
    memref.store %25, %arg4[%c0_11, %c0_12] : memref<1x1xf32, #tpu.memory_space<smem>>
    return
  }
  func.func @transform_0(%arg0: i32) -> (i32, i32) {
    %c0_i32 = arith.constant 0 : i32
    %c0_i32_0 = arith.constant 0 : i32
    return %arg0, %c0_i32 : i32, i32
  }
  func.func @transform_1(%arg0: i32) -> (i32, i32) {
    %c0_i32 = arith.constant 0 : i32
    %c0_i32_0 = arith.constant 0 : i32
    return %arg0, %c0_i32 : i32, i32
  }
  func.func @transform_2(%arg0: i32) -> (i32, i32) {
    %c0_i32 = arith.constant 0 : i32
    %c0_i32_0 = arith.constant 0 : i32
    return %arg0, %c0_i32 : i32, i32
  }
  func.func @transform_3(%arg0: i32) -> (i32, i32) {
    %c0_i32 = arith.constant 0 : i32
    %c0_i32_0 = arith.constant 0 : i32
    %c0_i32_1 = arith.constant 0 : i32
    return %c0_i32, %c0_i32_0 : i32, i32
  }
}

</mosaic_0001>

<llo_original>
// kernel: tpu_custom_call.1
$region0: #{tpu_custom_call.1}
  #allocation0 [shape = 'u32[]', space=smem, size = 0x4, offset = 0x4, fixed_abs, tag = 'smem constant byte address 0x4 - core index']
  #allocation1 [shape = 'u32[144,128]{1,0:T(1,128)}', space=vmem, size = 0x12000, scoped, tag = 'internal scratch']
  %s0 = inlined_call_operand.vmem [shape: f32[8,128], index: 0, kind: input, shape index: {}]
  %s1 = inlined_call_operand.vmem [shape: f32[8,1], index: 1, kind: input, shape index: {}]
  %s2 = inlined_call_operand.vmem [shape: f32[8,1], index: 2, kind: input, shape index: {}]
  %s3 = inlined_call_operand.hbm [shape: f32[1,1], index: 3, kind: output, shape index: {}]
  %s4 = sld [smem:[#allocation0]]
  $region26: #{tpu_custom_call.1} parent=0
    _
  %s6 = ssub.s32 1, %s4
  %s7 = scalar_select 0, %s6, %s4
  $region1: #{tpu_custom_call.1} parent=0
    #allocation2 [shape = 'u8[512]{0}', space=smem, size = 0x200, scoped, tag = 'output window, operand 0, single buffered']
    #allocation3 [shape = 's32[1]{0}', space=sflag, size = 0x4, scoped, tag = 'scoped memory for tpu_custom_call.1']
    %8 = vsyncpa [#allocation3], 0
    // Predicated region
    $region2: #{tpu_custom_call.1} parent=1 // pred_check
      _
    $region3: #{tpu_custom_call.1} parent=1 // pred_check_branch
      %10 = sbr.rel (0) target = $region5
    $region4: #{tpu_custom_call.1} parent=1 // pred_region
      _
    $region5: #{tpu_custom_call.1} parent=1 // pred_fallthru
      _
    // Predicated region
    $region6: #{tpu_custom_call.1} parent=1 // pred_check
      _
    $region7: #{tpu_custom_call.1} parent=1 // pred_check_branch
      %12 = sbr.rel (0) target = $region9
    $region8: #{tpu_custom_call.1} parent=1 // pred_region
      _
    $region9: #{tpu_custom_call.1} parent=1 // pred_fallthru
      _
    // Predicated region
    $region10: #{tpu_custom_call.1} parent=1 // pred_check
      _
    $region11: #{tpu_custom_call.1} parent=1 // pred_check_branch
      %14 = sbr.rel (0) target = $region13
    $region12: #{tpu_custom_call.1} parent=1 // pred_region
      _
    $region13: #{tpu_custom_call.1} parent=1 // pred_fallthru
      _
    %p15 = scmp.eq.s32.totalorder 0, 0
    // Predicated region
    $region14: #{tpu_custom_call.1} parent=1 // pred_check
      %p16 = pneg %p15
    $region15: #{tpu_custom_call.1} parent=1 // pred_check_branch
      %18 = sbr.rel (%p16) target = $region17
    $region16: #{tpu_custom_call.1} parent=1 // pred_region
      %s19 = scalar_lea.smem [#allocation2], 0
      %20 = sst [smem:[%s19]] 0.0
    $region17: #{tpu_custom_call.1} parent=1 // pred_fallthru
      _
    %v21 = vld [vmem:[%s1] sm:$0xff]
    %v22 = vld [vmem:[%s0] sm:$0xff]
    %24 = vset.pattern.permute.xlu0 0
    %25 = vperm.xlu0 %24, %v21
    %v26 = vpop.permute.xlu0 %25
    %v28 = vmul.f32 %v26, %v22
    %v29 = vmax.f32 %v28, 0.0
    %v30 = vand.u32 2147483647, %v28
    %v31 = vsub.f32 0.0, %v30
    %v32 = vmul.f32 %v31, 1.442695
    %v33 = vpow.pop %v32
    %v34 = vadd.f32 %v33, 1.0
    %v35 = vlog2.pop %v34
    %v36 = vmul.f32 %v35, 0.6931472
    %v37 = vadd.f32 %v29, %v36
    %s38 = sld [smem:[#allocation2]]
    %v39 = vld [vmem:[%s2] sm:$0xff]
    %41 = vset.pattern.permute.xlu0 0
    %42 = vperm.xlu0 %41, %v39
    %v43 = vpop.permute.xlu0 %42
    %v45 = vmul.f32 %v43, %v37
    %46 = vadd.xlane.f32.xlu0 %v45
    %v47 = vpop.xlane.xlu0 %46
    %v48 = vrot.slane %v47, 4
    %v49 = vadd.f32 %v47, %v48
    %v50 = vrot.slane %v49, 2
    %v51 = vadd.f32 %v49, %v50
    %v52 = vrot.slane %v51, 1
    %v53 = vadd.f32 %v51, %v52
    %s54 = vtos %v53
    %s55 = sadd.f32 %s38, %s54
    %s56 = scalar_lea.smem [#allocation2], 0
    %57 = sst [smem:[%s56]] %s55
    // Predicated region
    $region18: #{tpu_custom_call.1} parent=1 // pred_check
      _
    $region19: #{tpu_custom_call.1} parent=1 // pred_check_branch
      %59 = sbr.rel (0) target = $region21
    $region20: #{tpu_custom_call.1} parent=1 // pred_region
      %s61 = ssub.s32 16, 16
      %62 = vsyncadd [#allocation3], %s61
      %65 = dma.smem_to_hbm [#allocation2], 16, %s3, [#allocation3]
    $region21: #{tpu_custom_call.1} parent=1 // pred_fallthru
      _
    // Predicated region
    $region22: #{tpu_custom_call.1} parent=1 // pred_check
      _
    $region23: #{tpu_custom_call.1} parent=1 // pred_check_branch
      %67 = sbr.rel (0) target = $region25
    $region24: #{tpu_custom_call.1} parent=1 // pred_region
      %68 = dma.done [#allocation3], 16
    $region25: #{tpu_custom_call.1} parent=1 // pred_fallthru
      _
    %69 = sfence
    %70 = vsyncpa [#allocation3], 1

</llo_original>
